<compile_context>
chip_gen: v7x
topology: tpu7x:2x2x1
jax: 0.10.0
libtpu: 0.0.40
codegen_flags: <defaults>
</compile_context>

<pallas_src>
import functools

import jax
import jax.numpy as jnp
from jax.experimental import pallas as pl
from jax.experimental.pallas import tpu as pltpu

_LANE = 128
_SUBLANE = 8
_TM_MAX = 8192                      # rows/tile -> 4 MiB per f32 input tile
_SPLIT_ROWS = 512                   # force >=2 grid blocks above this (v7x megacore)
_VMEM_LIMIT = 32 * 1024 * 1024      # safe on v5e/v6e/v7x


def _round_up(a, b):
    return -(-a // b) * b


def _choose_tiling(m_rows):
    """Pick (tile_rows, n_blocks): choose block count first so tail padding is
    at most 7 rows (sublane alignment) instead of up to (tile-1) rows."""
    nb = pl.cdiv(m_rows, _TM_MAX)
    if nb < 2 and m_rows > _SPLIT_ROWS:
        nb = 2                                      # engage both v7x TensorCores
    tm = _round_up(pl.cdiv(m_rows, nb), _SUBLANE)
    tm = min(tm, (m_rows // _SUBLANE) * _SUBLANE)   # block never exceeds array rows
    nb = pl.cdiv(m_rows, tm)
    return tm, nb


def _as_slab(x, m_rows):
    """Lane-dense (m_rows, 128) slab in the native dtype.
    Pure reshape (no copy) when x.size == m_rows * 128 (the common case)."""
    padded = m_rows * _LANE
    if padded == x.size:
        return jnp.reshape(x, (m_rows, _LANE))
    flat = jnp.ravel(x)
    return jnp.pad(flat, (0, padded - flat.size)).reshape(m_rows, _LANE)


def _mse_partial_sum_kernel(y_ref, t_ref, o_ref, *, tm, valid_rows, ragged):
    """Per-block partial sums of (y - t)^2, reduced to a single (8, 128) vreg."""
    d = y_ref[...].astype(jnp.float32) - t_ref[...].astype(jnp.float32)
    sq = d * d
    if ragged:
        # Mask garbage rows of the (non-divisible) last block.
        rows = pl.program_id(0) * tm + jax.lax.broadcasted_iota(
            jnp.int32, (tm, _LANE), 0)
        sq = jnp.where(rows < valid_rows, sq, 0.0)
    psum = jnp.sum(sq.reshape(tm // _SUBLANE, _SUBLANE, _LANE), axis=0)
    o_ref[...] = psum[None]


def _mse_none_kernel(y_ref, t_ref, o_ref):
    """Elementwise squared difference in the input dtype.
    Out-of-bounds rows of a ragged last block are dropped on store."""
    d = y_ref[...] - t_ref[...]
    o_ref[...] = (d * d).astype(o_ref.dtype)


def mse_loss(yhat, target, reduction="mean"):
    """Pallas implementation of F.mse_loss(yhat, target, reduction=...)."""
    if yhat.shape != target.shape:
        shape = jnp.broadcast_shapes(yhat.shape, target.shape)
        yhat = jnp.broadcast_to(yhat, shape)
        target = jnp.broadcast_to(target, shape)
    orig_shape = yhat.shape
    n = yhat.size
    out_dtype = jnp.promote_types(yhat.dtype, target.dtype)

    m_rows = max(_round_up(max(n, 1), _LANE) // _LANE, _SUBLANE)
    padded_elems = m_rows * _LANE
    tm, nb = _choose_tiling(m_rows)
    ragged = (nb * tm != m_rows)

    y2 = _as_slab(yhat, m_rows)
    t2 = _as_slab(target, m_rows)

    in_specs = [
        pl.BlockSpec((tm, _LANE), lambda i: (i, 0)),
        pl.BlockSpec((tm, _LANE), lambda i: (i, 0)),
    ]
    cparams = pltpu.CompilerParams(
        dimension_semantics=("parallel",),
        vmem_limit_bytes=_VMEM_LIMIT,
    )
    in_bytes = n * (jnp.dtype(yhat.dtype).itemsize + jnp.dtype(target.dtype).itemsize)

    if reduction == "none":
        out2 = pl.pallas_call(
            _mse_none_kernel,
            out_shape=jax.ShapeDtypeStruct((m_rows, _LANE), out_dtype),
            grid_spec=pltpu.PrefetchScalarGridSpec(
                num_scalar_prefetch=0,
                grid=(nb,),
                in_specs=in_specs,
                out_specs=pl.BlockSpec((tm, _LANE), lambda i: (i, 0)),
            ),
            compiler_params=cparams,
            cost_estimate=pl.CostEstimate(
                flops=2 * n,
                transcendentals=0,
                bytes_accessed=in_bytes
                + padded_elems * jnp.dtype(out_dtype).itemsize,
            ),
        )(y2, t2)
        if padded_elems == n:
            return out2.reshape(orig_shape)
        # Only hit when n is not a multiple of 128 (uncommon shapes).
        return out2.reshape(-1)[:n].reshape(orig_shape)

    if reduction not in ("sum", "mean"):
        raise ValueError(f"unknown reduction: {reduction}")

    # 'sum' / 'mean': per-block (8,128)-aligned partial sums (f32 accumulate,
    # unmasked stores); the tiny (nb, 8, 128) final reduce runs in the wrapper.
    partials = pl.pallas_call(
        functools.partial(_mse_partial_sum_kernel,
                          tm=tm, valid_rows=m_rows, ragged=ragged),
        out_shape=jax.ShapeDtypeStruct((nb, _SUBLANE, _LANE), jnp.float32),
        grid_spec=pltpu.PrefetchScalarGridSpec(
            num_scalar_prefetch=0,
            grid=(nb,),
            in_specs=in_specs,
            out_specs=pl.BlockSpec((1, _SUBLANE, _LANE), lambda i: (i, 0, 0)),
        ),
        compiler_params=cparams,
        cost_estimate=pl.CostEstimate(
            flops=3 * n,
            transcendentals=0,
            bytes_accessed=in_bytes + nb * _SUBLANE * _LANE * 4,
        ),
    )(y2, t2)

    total = jnp.sum(partials)
    if reduction == "sum":
        return total.astype(out_dtype)
    return (total / jnp.float32(n)).astype(out_dtype)


class MSE:
    """Pallas port of the torch MSE wrapper module."""

    def __init__(self, reduction: str = "mean", **kwargs):
        self.reduction = reduction

    def __call__(self, yhat, target, **kwargs):
        return mse_loss(yhat, target, reduction=self.reduction)


if __name__ == "__main__":
    key = jax.random.PRNGKey(0)
    k1, k2, k3, k4, k5, k6 = jax.random.split(key, 6)

    B, C, H, W = 2, 4, 16, 16
    yhat = jax.random.normal(k1, (B, C, H, W), dtype=jnp.float32)
    target = jax.random.normal(k2, (B, C, H, W), dtype=jnp.float32)

    # -- 'mean' --
    loss = jax.block_until_ready(MSE(reduction="mean")(yhat, target))
    ref = jnp.mean((yhat - target) ** 2)
    assert jnp.allclose(loss, ref, rtol=1e-5, atol=1e-6), (loss, ref)

    # -- 'none' (dtype and shape must match input) --
    loss_none = jax.block_until_ready(MSE(reduction="none")(yhat, target))
    assert loss_none.shape == yhat.shape and loss_none.dtype == yhat.dtype
    assert jnp.allclose(loss_none, (yhat - target) ** 2, rtol=1e-5, atol=1e-6)

    # -- 'sum' --
    loss_sum = jax.block_until_ready(MSE(reduction="sum")(yhat, target))
    assert jnp.allclose(loss_sum, jnp.sum((yhat - target) ** 2), rtol=1e-5, atol=1e-4)

    # -- odd shape: exercises 128-padding, ragged last block, de-pad slice --
    a = jax.random.normal(k3, (3, 5, 7, 11), dtype=jnp.float32)
    b = jax.random.normal(k4, (3, 5, 7, 11), dtype=jnp.float32)
    m_odd = jax.block_until_ready(MSE("mean")(a, b))
    assert jnp.allclose(m_odd, jnp.mean((a - b) ** 2), rtol=1e-5, atol=1e-5)
    n_odd = jax.block_until_ready(MSE("none")(a, b))
    assert n_odd.shape == a.shape
    assert jnp.allclose(n_odd, (a - b) ** 2, rtol=1e-5, atol=1e-6)

    # -- medium shape: >=2 grid blocks + in-kernel tail masking, no wrapper pad
    #    (76800 elements, multiple of 128 but not of the tile) --
    c = jax.random.normal(k5, (6, 128, 100), dtype=jnp.float32)
    d = jax.random.normal(k6, (6, 128, 100), dtype=jnp.float32)
    m_med = jax.block_until_ready(MSE("mean")(c, d))
    assert jnp.allclose(m_med, jnp.mean((c - d) ** 2), rtol=1e-5, atol=1e-5)
    n_med = jax.block_until_ready(MSE("none")(c, d))
    assert jnp.allclose(n_med, (c - d) ** 2, rtol=1e-5, atol=1e-6)

    # -- bf16: 'none' stays bf16 (matches torch); reductions accumulate in f32 --
    yb, tb = yhat.astype(jnp.bfloat16), target.astype(jnp.bfloat16)
    nb_out = jax.block_until_ready(MSE("none")(yb, tb))
    assert nb_out.dtype == jnp.bfloat16
    assert jnp.allclose(nb_out.astype(jnp.float32),
                        ((yb - tb) ** 2).astype(jnp.float32), rtol=0, atol=1e-2)

    print("KERNEL_OK")
</pallas_src>

<mosaic_0001>
module attributes {stable_mosaic.version = 11 : i64} {
  func.func @_mse_partial_sum_kernel(%arg0: i32, %arg1: memref<16x128xf32, #tpu.memory_space<vmem>>, %arg2: memref<16x128xf32, #tpu.memory_space<vmem>>, %arg3: memref<1x8x128xf32, #tpu.memory_space<vmem>>) attributes {dimension_semantics = [#tpu.dimension_semantics<parallel>], iteration_bounds = array<i64: 1>, scalar_prefetch = 0 : i64, scratch_operands = 0 : i64, tpu.core_type = #tpu.core_type<tc>, window_params = [{transform_indices = @transform_0, window_bounds = array<i64: 16, 128>}, {transform_indices = @transform_1, window_bounds = array<i64: 16, 128>}, {transform_indices = @transform_2, window_bounds = array<i64: 1, 8, 128>}]} {
    %c0 = arith.constant 0 : index
    %c0_0 = arith.constant 0 : index
    %0 = vector.load %arg1[%c0, %c0_0] : memref<16x128xf32, #tpu.memory_space<vmem>>, vector<16x128xf32>
    %c0_1 = arith.constant 0 : index
    %c0_2 = arith.constant 0 : index
    %1 = vector.load %arg2[%c0_1, %c0_2] : memref<16x128xf32, #tpu.memory_space<vmem>>, vector<16x128xf32>
    %2 = arith.subf %0, %1 : vector<16x128xf32>
    %3 = arith.mulf %2, %2 : vector<16x128xf32>
    %4 = vector.shape_cast %3 : vector<16x128xf32> to vector<2x8x128xf32>
    %cst = arith.constant dense<0.000000e+00> : vector<8x128xf32>
    %5 = vector.multi_reduction <add>, %4, %cst [0] : vector<2x8x128xf32> to vector<8x128xf32>
    %6 = vector.shape_cast %5 : vector<8x128xf32> to vector<1x8x128xf32>
    %c0_3 = arith.constant 0 : index
    %c0_4 = arith.constant 0 : index
    %c0_5 = arith.constant 0 : index
    %7 = vector.load %arg3[%c0_3, %c0_4, %c0_5] : memref<1x8x128xf32, #tpu.memory_space<vmem>>, vector<1x8x128xf32>
    tpu.vector_store %arg3[%c0_3, %c0_4, %c0_5], %6 {strides = array<i32>} : memref<1x8x128xf32, #tpu.memory_space<vmem>>, vector<1x8x128xf32>,
    return
  }
  func.func @transform_0(%arg0: i32) -> (i32, i32) {
    %c0_i32 = arith.constant 0 : i32
    %c0_i32_0 = arith.constant 0 : i32
    return %arg0, %c0_i32 : i32, i32
  }
  func.func @transform_1(%arg0: i32) -> (i32, i32) {
    %c0_i32 = arith.constant 0 : i32
    %c0_i32_0 = arith.constant 0 : i32
    return %arg0, %c0_i32 : i32, i32
  }
  func.func @transform_2(%arg0: i32) -> (i32, i32, i32) {
    %c0_i32 = arith.constant 0 : i32
    %c0_i32_0 = arith.constant 0 : i32
    %c0_i32_1 = arith.constant 0 : i32
    return %arg0, %c0_i32, %c0_i32_0 : i32, i32, i32
  }
}

</mosaic_0001>

<llo_original>
// kernel: tpu_custom_call.1
$region0: #{tpu_custom_call.1}
  #allocation0 [shape = 'u32[]', space=smem, size = 0x4, offset = 0x4, fixed_abs, tag = 'smem constant byte address 0x4 - core index']
  #allocation1 [shape = 'u32[144,128]{1,0:T(1,128)}', space=vmem, size = 0x12000, scoped, tag = 'internal scratch']
  %s0 = inlined_call_operand.hbm [shape: f32[16,128], index: 0, kind: input, shape index: {}]
  %s1 = inlined_call_operand.hbm [shape: f32[16,128], index: 1, kind: input, shape index: {}]
  %s2 = inlined_call_operand.hbm [shape: f32[1,8,128], index: 2, kind: output, shape index: {}]
  %s3 = sld [smem:[#allocation0]]
  $region26: #{tpu_custom_call.1} parent=0
    _
  %s5 = ssub.s32 1, %s3
  %s6 = scalar_select 0, %s5, %s3
  $region1: #{tpu_custom_call.1} parent=0
    #allocation2 [shape = 'u8[8192]{0}', space=vmem, size = 0x2000, scoped, tag = 'input window, operand 0, single buffered']
    #allocation3 [shape = 's32[1]{0}', space=sflag, size = 0x4, scoped, tag = 'scoped memory for tpu_custom_call.1']
    #allocation4 [shape = 's32[1]{0}', space=sflag, size = 0x4, scoped, tag = 'scoped memory for tpu_custom_call.1']
    #allocation5 [shape = 'u8[8192]{0}', space=vmem, size = 0x2000, scoped, tag = 'input window, operand 1, single buffered']
    #allocation6 [shape = 's32[1]{0}', space=sflag, size = 0x4, scoped, tag = 'scoped memory for tpu_custom_call.1']
    #allocation7 [shape = 'u8[4096]{0}', space=vmem, size = 0x1000, scoped, tag = 'output window, operand 0, single buffered']
    %7 = vsyncpa [#allocation3], 0
    %8 = vsyncpa [#allocation6], 0
    %9 = vsyncpa [#allocation4], 0
    // Predicated region
    $region2: #{tpu_custom_call.1} parent=1 // pred_check
      _
    $region3: #{tpu_custom_call.1} parent=1 // pred_check_branch
      %11 = sbr.rel (0) target = $region5
    $region4: #{tpu_custom_call.1} parent=1 // pred_region
      %s13 = ssub.s32 256, 256
      %14 = vsyncadd [#allocation3], %s13
      %s15 = sshll.u32 [#allocation2], 4
      %s16 = int_to_ptr.vmem [resolvable:$true] %s15
      %21 = dma.hbm_to_vmem [thread:$0]  %s0, 256, %s16, [#allocation3], 128, 128, 8
    $region5: #{tpu_custom_call.1} parent=1 // pred_fallthru
      _
    // Predicated region
    $region6: #{tpu_custom_call.1} parent=1 // pred_check
      _
    $region7: #{tpu_custom_call.1} parent=1 // pred_check_branch
      %23 = sbr.rel (0) target = $region9
    $region8: #{tpu_custom_call.1} parent=1 // pred_region
      %s25 = ssub.s32 256, 256
      %26 = vsyncadd [#allocation6], %s25
      %s27 = sshll.u32 [#allocation5], 4
      %s28 = int_to_ptr.vmem [resolvable:$true] %s27
      %33 = dma.hbm_to_vmem [thread:$0]  %s1, 256, %s28, [#allocation6], 128, 128, 8
    $region9: #{tpu_custom_call.1} parent=1 // pred_fallthru
      _
    // Predicated region
    $region10: #{tpu_custom_call.1} parent=1 // pred_check
      _
    $region11: #{tpu_custom_call.1} parent=1 // pred_check_branch
      %35 = sbr.rel (0) target = $region13
    $region12: #{tpu_custom_call.1} parent=1 // pred_region
      %36 = dma.done [#allocation3], 256
    $region13: #{tpu_custom_call.1} parent=1 // pred_fallthru
      _
    // Predicated region
    $region14: #{tpu_custom_call.1} parent=1 // pred_check
      _
    $region15: #{tpu_custom_call.1} parent=1 // pred_check_branch
      %38 = sbr.rel (0) target = $region17
    $region16: #{tpu_custom_call.1} parent=1 // pred_region
      %39 = dma.done [#allocation6], 256
    $region17: #{tpu_custom_call.1} parent=1 // pred_fallthru
      _
    %v40 = vld [vmem:[#allocation2] sm:$0xff]
    %v41 = vld [vmem:[#allocation2 + $0x8] sm:$0xff]
    %v42 = vld [vmem:[#allocation5] sm:$0xff]
    %v43 = vld [vmem:[#allocation5 + $0x8] sm:$0xff]
    %v44 = vsub.f32 %v40, %v42
    %v45 = vsub.f32 %v41, %v43
    %v46 = vmul.f32 %v44, %v44
    %v47 = vmul.f32 %v45, %v45
    %v48 = vadd.f32 %v46, %v47
    %49 = vst [vmem:[#allocation7] sm:$0xff] %v48
    // Predicated region
    $region18: #{tpu_custom_call.1} parent=1 // pred_check
      _
    $region19: #{tpu_custom_call.1} parent=1 // pred_check_branch
      %51 = sbr.rel (0) target = $region21
    $region20: #{tpu_custom_call.1} parent=1 // pred_region
      %s53 = ssub.s32 128, 128
      %54 = vsyncadd [#allocation4], %s53
      %s56 = sshll.u32 [#allocation7], 4
      %s57 = int_to_ptr.vmem [resolvable:$true] %s56
      %59 = dma.vmem_to_hbm [thread:$0]  %s57, 128, %s2, [#allocation4]
    $region21: #{tpu_custom_call.1} parent=1 // pred_fallthru
      _
    // Predicated region
    $region22: #{tpu_custom_call.1} parent=1 // pred_check
      _
    $region23: #{tpu_custom_call.1} parent=1 // pred_check_branch
      %61 = sbr.rel (0) target = $region25
    $region24: #{tpu_custom_call.1} parent=1 // pred_region
      %62 = dma.done [#allocation4], 128
    $region25: #{tpu_custom_call.1} parent=1 // pred_fallthru
      _
    %63 = vsyncpa [#allocation3], 1
    %64 = vsyncpa [#allocation6], 1
    %65 = vsyncpa [#allocation4], 1

</llo_original>
